<compile_context>
chip_gen: v7x
topology: tpu7x:2x2x1
jax: 0.10.0
libtpu: 0.0.40
codegen_flags: <defaults>
</compile_context>

<pallas_src>
import jax
import jax.numpy as jnp
from jax.experimental import pallas as pl
from jax.experimental.pallas import tpu as pltpu


def linear_kernel(wb_ref, x_ref, o_ref):
    # wb_ref: f32[2] in SMEM (wb_ref[0] = weight, wb_ref[1] = bias).
    # x_ref, o_ref: (N, 1) full-array blocks in VMEM.
    w = wb_ref[0]
    b = wb_ref[1]
    # Pure VPU path: one fused multiply-add over the (N, 1) slab.
    o_ref[...] = (x_ref[...] * w + b).astype(o_ref.dtype)


def linear_forward(x, weight, bias):
    """Pallas implementation of nn.Linear(1, 1).forward: y = x @ W^T + b."""
    N, in_f = x.shape
    out_f = weight.shape[0]
    # Fast path specialized for nn.Linear(1, 1); other shapes are unsupported.
    assert in_f == 1 and out_f == 1, "kernel specialized for nn.Linear(1, 1)"

    # Pack the two scalar parameters into one tiny 1-D SMEM array.
    wb = jnp.stack(
        [weight.reshape(()).astype(jnp.float32), bias.reshape(()).astype(jnp.float32)]
    )

    y = pl.pallas_call(
        linear_kernel,
        out_shape=jax.ShapeDtypeStruct((N, out_f), x.dtype),
        in_specs=[
            pl.BlockSpec(memory_space=pltpu.MemorySpace.SMEM),  # [w, b] scalars
            pl.BlockSpec(memory_space=pltpu.MemorySpace.VMEM),  # x (N, 1)
        ],
        out_specs=pl.BlockSpec(memory_space=pltpu.MemorySpace.VMEM),
    )(wb, x)
    return y


if __name__ == "__main__":
    key = jax.random.PRNGKey(0)
    kx, kw, kb = jax.random.split(key, 3)

    # Input matching `x = torch.randn(100, 1)`
    x = jax.random.normal(kx, (100, 1), dtype=jnp.float32)

    # Deterministic parameter init (nn.Linear(1, 1): weight (1,1), bias (1,)).
    # PyTorch uses U(-1/sqrt(in), 1/sqrt(in)); in=1 -> U(-1, 1).
    weight = jax.random.uniform(kw, (1, 1), minval=-1.0, maxval=1.0,
                                dtype=jnp.float32)
    bias = jax.random.uniform(kb, (1,), minval=-1.0, maxval=1.0,
                              dtype=jnp.float32)

    out = linear_forward(x, weight, bias)
    jax.block_until_ready(out)

    # Reference check in plain JAX
    ref = x @ weight.T + bias
    assert out.shape == (100, 1)
    assert jnp.allclose(out, ref, atol=1e-5, rtol=1e-5)
    print("KERNEL_OK")
</pallas_src>

<mosaic_0001>
module attributes {stable_mosaic.version = 11 : i64} {
  func.func @linear_kernel(%arg0: memref<2xf32, #tpu.memory_space<smem>>, %arg1: memref<100x1xf32, #tpu.memory_space<vmem>>, %arg2: memref<100x1xf32, #tpu.memory_space<vmem>>) attributes {dimension_semantics = [], scalar_prefetch = 0 : i64, scratch_operands = 0 : i64, tpu.core_type = #tpu.core_type<tc>} {
    %c0 = arith.constant 0 : index
    %0 = memref.load %arg0[%c0] : memref<2xf32, #tpu.memory_space<smem>>
    %c1 = arith.constant 1 : index
    %1 = memref.load %arg0[%c1] : memref<2xf32, #tpu.memory_space<smem>>
    %c0_0 = arith.constant 0 : index
    %c0_1 = arith.constant 0 : index
    %2 = vector.load %arg1[%c0_0, %c0_1] : memref<100x1xf32, #tpu.memory_space<vmem>>, vector<100x1xf32>
    %3 = vector.broadcast %0 : f32 to vector<100x1xf32>
    %4 = arith.mulf %2, %3 : vector<100x1xf32>
    %5 = vector.broadcast %1 : f32 to vector<100x1xf32>
    %6 = arith.addf %4, %5 : vector<100x1xf32>
    %c0_2 = arith.constant 0 : index
    %c0_3 = arith.constant 0 : index
    %7 = vector.load %arg2[%c0_2, %c0_3] : memref<100x1xf32, #tpu.memory_space<vmem>>, vector<100x1xf32>
    tpu.vector_store %arg2[%c0_2, %c0_3], %6 {strides = array<i32>} : memref<100x1xf32, #tpu.memory_space<vmem>>, vector<100x1xf32>,
    return
  }
}

</mosaic_0001>

<llo_original>
// kernel: tpu_custom_call.1
$region0: #{tpu_custom_call.1}
  #allocation0 [shape = 'u32[]', space=smem, size = 0x4, offset = 0x4, fixed_abs, tag = 'smem constant byte address 0x4 - core index']
  #allocation1 [shape = 'u32[144,128]{1,0:T(1,128)}', space=vmem, size = 0x12000, scoped, tag = 'internal scratch']
  %s0 = inlined_call_operand.vmem [shape: f32[2], index: 0, kind: input, shape index: {}]
  %s1 = inlined_call_operand.vmem [shape: f32[100,1], index: 1, kind: input, shape index: {}]
  %s2 = inlined_call_operand.vmem [shape: f32[100,1], index: 2, kind: output, shape index: {}]
  %s3 = sld [smem:[#allocation0]]
  $region22: #{tpu_custom_call.1} parent=0
    _
  %s5 = ssub.s32 1, %s3
  %s6 = scalar_select 0, %s5, %s3
  $region1: #{tpu_custom_call.1} parent=0
    #allocation2 [shape = 'u8[512]{0}', space=smem, size = 0x200, scoped, tag = 'input window, operand 0, single buffered']
    #allocation3 [shape = 's32[1]{0}', space=sflag, size = 0x4, scoped, tag = 'scoped memory for tpu_custom_call.1']
    %7 = vsyncpa [#allocation3], 0
    // Predicated region
    $region2: #{tpu_custom_call.1} parent=1 // pred_check
      _
    $region3: #{tpu_custom_call.1} parent=1 // pred_check_branch
      %9 = sbr.rel (0) target = $region5
    $region4: #{tpu_custom_call.1} parent=1 // pred_region
      %s11 = ssub.s32 16, 16
      %12 = vsyncadd [#allocation3], %s11
      %s14 = sshll.u32 %s0, 4
      %s15 = int_to_ptr.vmem [resolvable:$true] %s14
      %17 = dma.vmem_to_smem %s15, 16, [#allocation2], [#allocation3]
    $region5: #{tpu_custom_call.1} parent=1 // pred_fallthru
      _
    // Predicated region
    $region6: #{tpu_custom_call.1} parent=1 // pred_check
      _
    $region7: #{tpu_custom_call.1} parent=1 // pred_check_branch
      %19 = sbr.rel (0) target = $region9
    $region8: #{tpu_custom_call.1} parent=1 // pred_region
      _
    $region9: #{tpu_custom_call.1} parent=1 // pred_fallthru
      _
    // Predicated region
    $region10: #{tpu_custom_call.1} parent=1 // pred_check
      _
    $region11: #{tpu_custom_call.1} parent=1 // pred_check_branch
      %21 = sbr.rel (0) target = $region13
    $region12: #{tpu_custom_call.1} parent=1 // pred_region
      %22 = dma.done [#allocation3], 16
    $region13: #{tpu_custom_call.1} parent=1 // pred_fallthru
      _
    %23 = sfence
    %s24 = sld [smem:[#allocation2]]
    %s25 = sld [smem:[#allocation2 + $0x1]]
    %v26 = vld [vmem:[%s1] sm:$0xff]
    %v27 = vld [vmem:[%s1 + $0x8] sm:$0xff]
    %v28 = vld [vmem:[%s1 + $0x10] sm:$0xff]
    %v29 = vld [vmem:[%s1 + $0x18] sm:$0xff]
    %v30 = vld [vmem:[%s1 + $0x20] sm:$0xff]
    %v31 = vld [vmem:[%s1 + $0x28] sm:$0xff]
    %v32 = vld [vmem:[%s1 + $0x30] sm:$0xff]
    %v33 = vld [vmem:[%s1 + $0x38] sm:$0xff]
    %v34 = vld [vmem:[%s1 + $0x40] sm:$0xff]
    %v35 = vld [vmem:[%s1 + $0x48] sm:$0xff]
    %v36 = vld [vmem:[%s1 + $0x50] sm:$0xff]
    %v37 = vld [vmem:[%s1 + $0x58] sm:$0xff]
    %v38 = vld [vmem:[%s1 + $0x60] sm:$0xf]
    %v39 = vstv %s24
    %v40 = vmul.f32 %v26, %v39
    %v41 = vmul.f32 %v27, %v39
    %v42 = vmul.f32 %v28, %v39
    %v43 = vmul.f32 %v29, %v39
    %v44 = vmul.f32 %v30, %v39
    %v45 = vmul.f32 %v31, %v39
    %v46 = vmul.f32 %v32, %v39
    %v47 = vmul.f32 %v33, %v39
    %v48 = vmul.f32 %v34, %v39
    %v49 = vmul.f32 %v35, %v39
    %v50 = vmul.f32 %v36, %v39
    %v51 = vmul.f32 %v37, %v39
    %v52 = vmul.f32 %v38, %v39
    %v53 = vstv %s25
    %v54 = vadd.f32 %v40, %v53
    %v55 = vadd.f32 %v41, %v53
    %v56 = vadd.f32 %v42, %v53
    %v57 = vadd.f32 %v43, %v53
    %v58 = vadd.f32 %v44, %v53
    %v59 = vadd.f32 %v45, %v53
    %v60 = vadd.f32 %v46, %v53
    %v61 = vadd.f32 %v47, %v53
    %v62 = vadd.f32 %v48, %v53
    %v63 = vadd.f32 %v49, %v53
    %v64 = vadd.f32 %v50, %v53
    %v65 = vadd.f32 %v51, %v53
    %v66 = vadd.f32 %v52, %v53
    %vm67 = vcmask 7168
    %68 = vst.msk [vmem:[%s2] sm:$0xff] %vm67, %v54
    %69 = vst.msk [vmem:[%s2 + $0x8] sm:$0xff] %vm67, %v55
    %70 = vst.msk [vmem:[%s2 + $0x10] sm:$0xff] %vm67, %v56
    %71 = vst.msk [vmem:[%s2 + $0x18] sm:$0xff] %vm67, %v57
    %72 = vst.msk [vmem:[%s2 + $0x20] sm:$0xff] %vm67, %v58
    %73 = vst.msk [vmem:[%s2 + $0x28] sm:$0xff] %vm67, %v59
    %74 = vst.msk [vmem:[%s2 + $0x30] sm:$0xff] %vm67, %v60
    %75 = vst.msk [vmem:[%s2 + $0x38] sm:$0xff] %vm67, %v61
    %76 = vst.msk [vmem:[%s2 + $0x40] sm:$0xff] %vm67, %v62
    %77 = vst.msk [vmem:[%s2 + $0x48] sm:$0xff] %vm67, %v63
    %78 = vst.msk [vmem:[%s2 + $0x50] sm:$0xff] %vm67, %v64
    %79 = vst.msk [vmem:[%s2 + $0x58] sm:$0xff] %vm67, %v65
    %vm80 = vcmask 3072
    %81 = vst.msk [vmem:[%s2 + $0x60] sm:$0xf] %vm80, %v66
    // Predicated region
    $region14: #{tpu_custom_call.1} parent=1 // pred_check
      _
    $region15: #{tpu_custom_call.1} parent=1 // pred_check_branch
      %83 = sbr.rel (0) target = $region17
    $region16: #{tpu_custom_call.1} parent=1 // pred_region
      _
    $region17: #{tpu_custom_call.1} parent=1 // pred_fallthru
      _
    // Predicated region
    $region18: #{tpu_custom_call.1} parent=1 // pred_check
      _
    $region19: #{tpu_custom_call.1} parent=1 // pred_check_branch
      %85 = sbr.rel (0) target = $region21
    $region20: #{tpu_custom_call.1} parent=1 // pred_region
      _
    $region21: #{tpu_custom_call.1} parent=1 // pred_fallthru
      _
    %86 = vsyncpa [#allocation3], 1

</llo_original>
